<compile_context>
chip_gen: v7x
topology: tpu7x:2x2x1
jax: 0.10.0
libtpu: 0.0.40
codegen_flags: <defaults>
</compile_context>

<pallas_src>
import functools

import jax
import jax.numpy as jnp
from jax.experimental import pallas as pl
from jax.experimental.pallas import tpu as pltpu  # noqa: F401  (no TPU-specific params needed at these sizes)

_LANE = 128


def _round_up(n, m):
    return ((n + m - 1) // m) * m


def _erf(z):
    # Abramowitz–Stegun 7.1.26 rational approximation of erf (max abs err 1.5e-7).
    # Uses only abs/exp/mul/add/div/where so it lowers on every TPU generation.
    a1, a2, a3, a4, a5 = (0.254829592, -0.284496736, 1.421413741,
                          -1.453152027, 1.061405429)
    p = 0.3275911
    az = jnp.abs(z)
    t = 1.0 / (1.0 + p * az)
    poly = ((((a5 * t + a4) * t + a3) * t + a2) * t + a1) * t
    e = 1.0 - poly * jnp.exp(-az * az)
    return jnp.where(z < 0, -e, e)


def _gelu_exact(x):
    # Exact (erf) GELU — matches PyTorch nn.GELU default.
    return 0.5 * x * (1.0 + _erf(x * 0.7071067811865475))


def _siamese_mlp_kernel(x1_ref, x2_ref, w1_ref, b1_ref, w2_ref, b2_ref, out_ref):
    # x1_ref/x2_ref: (B, D) f32        w1_ref: (D, Hp) bf16   b1_ref: (1, Hp) f32
    # w2_ref: (Hp, Cp) bf16            b2_ref: (1, Cp) f32    out_ref: (2, B, Cp) f32
    # Shared weights are loaded once and reused by both branches.
    w1 = w1_ref[...]
    b1 = b1_ref[...]
    w2 = w2_ref[...]
    b2 = b2_ref[...]

    def branch(x_ref):
        x = x_ref[...].astype(jnp.bfloat16)                       # bf16 MXU operand
        h = jnp.dot(x, w1, preferred_element_type=jnp.float32) + b1
        h = _gelu_exact(h)                                        # exact erf GELU (f32)
        o = jnp.dot(h.astype(jnp.bfloat16), w2,
                    preferred_element_type=jnp.float32)
        return o + b2

    out_ref[0] = branch(x1_ref)
    out_ref[1] = branch(x2_ref)


def pack_params(params):
    """One-time pad+cast of the shared base-model weights (hoisted out of forward).

    Zero-padding Hp/Cp is semantically a no-op: gelu(0)=0 and the padded w2
    rows/cols contribute 0; the wrapper slices the logical num_classes back out.
    """
    w1, b1, w2, b2 = params
    D, H = w1.shape
    C = w2.shape[1]
    Hp = _round_up(H, _LANE)
    Cp = _round_up(C, _LANE)
    w1p = jnp.pad(w1, ((0, 0), (0, Hp - H))).astype(jnp.bfloat16)
    b1p = jnp.pad(b1, ((0, 0), (0, Hp - H))).astype(jnp.float32)
    w2p = jnp.pad(w2, ((0, Hp - H), (0, Cp - C))).astype(jnp.bfloat16)
    b2p = jnp.pad(b2, ((0, 0), (0, Cp - C))).astype(jnp.float32)
    return (w1p, b1p, w2p, b2p)


def siamese_forward(x1, x2, packed_params, num_classes):
    """SiameseNetwork.forward: shared-weight base model on x1 and x2.

    One gridless pallas_call: both branches computed in a single invocation with
    the pre-packed weights DMA'd into VMEM exactly once.
    """
    w1p, b1p, w2p, b2p = packed_params
    B = x1.shape[0]
    D, Hp = w1p.shape
    Cp = w2p.shape[1]

    x1f = x1.reshape(B, D)   # contiguous reshape — no copy, no extra launch
    x2f = x2.reshape(B, D)

    # NOTE: at scaled-up B, add a batch-tile grid axis ("parallel") and keep the
    # weight specs constant-index + pl.Buffered(1) so they stay resident in VMEM.
    out = pl.pallas_call(
        _siamese_mlp_kernel,
        out_shape=jax.ShapeDtypeStruct((2, B, Cp), jnp.float32),
        in_specs=[
            pl.BlockSpec((B, D), lambda: (0, 0)),
            pl.BlockSpec((B, D), lambda: (0, 0)),
            pl.BlockSpec((D, Hp), lambda: (0, 0)),
            pl.BlockSpec((1, Hp), lambda: (0, 0)),
            pl.BlockSpec((Hp, Cp), lambda: (0, 0)),
            pl.BlockSpec((1, Cp), lambda: (0, 0)),
        ],
        out_specs=pl.BlockSpec((2, B, Cp), lambda: (0, 0, 0)),
    )(x1f, x2f, w1p, b1p, w2p, b2p)

    logits = out[:, :, :num_classes]
    return logits[0], logits[1]


def init_params(key, d_in, hidden, num_classes):
    k1, k2 = jax.random.split(key)
    w1 = jax.random.normal(k1, (d_in, hidden), jnp.float32) * (1.0 / jnp.sqrt(d_in))
    b1 = jnp.zeros((1, hidden), jnp.float32)
    w2 = jax.random.normal(k2, (hidden, num_classes), jnp.float32) * (1.0 / jnp.sqrt(hidden))
    b2 = jnp.zeros((1, num_classes), jnp.float32)
    return (w1, b1, w2, b2)


if __name__ == "__main__":
    key = jax.random.PRNGKey(0)
    kx1, kx2, kp = jax.random.split(key, 3)

    B, Cimg, Hs, Ws = 2, 4, 16, 16       # small NCHW image inputs
    hidden, num_classes = 32, 8
    d_in = Cimg * Hs * Ws                # 1024

    x1 = jax.random.normal(kx1, (B, Cimg, Hs, Ws), jnp.float32)
    x2 = jax.random.normal(kx2, (B, Cimg, Hs, Ws), jnp.float32)
    params = init_params(kp, d_in, hidden, num_classes)

    # One-time weight packing (pad to multiples of 128, cast to bf16).
    packed = pack_params(params)

    fwd = jax.jit(functools.partial(siamese_forward, num_classes=num_classes))
    out1, out2 = fwd(x1, x2, packed)
    jax.block_until_ready((out1, out2))

    # Reference check (f32, shared weights, exact erf GELU); tolerance covers
    # the bf16 MXU operands.
    def ref(x):
        w1, b1, w2, b2 = params
        h = jax.nn.gelu(x.reshape(B, -1) @ w1 + b1, approximate=False)
        return h @ w2 + b2

    assert out1.shape == (B, num_classes) and out2.shape == (B, num_classes)
    assert jnp.allclose(out1, ref(x1), atol=5e-2, rtol=5e-2)
    assert jnp.allclose(out2, ref(x2), atol=5e-2, rtol=5e-2)

    print("KERNEL_OK")
</pallas_src>

<mosaic_0001>
module attributes {stable_mosaic.version = 11 : i64} {
  func.func @_siamese_mlp_kernel(%arg0: memref<2x1024xf32, #tpu.memory_space<vmem>>, %arg1: memref<2x1024xf32, #tpu.memory_space<vmem>>, %arg2: memref<1024x128xbf16, #tpu.memory_space<vmem>>, %arg3: memref<1x128xf32, #tpu.memory_space<vmem>>, %arg4: memref<128x128xbf16, #tpu.memory_space<vmem>>, %arg5: memref<1x128xf32, #tpu.memory_space<vmem>>, %arg6: memref<2x2x128xf32, #tpu.memory_space<vmem>>) attributes {dimension_semantics = [], scalar_prefetch = 0 : i64, scratch_operands = 0 : i64, tpu.core_type = #tpu.core_type<tc>} {
    %c0 = arith.constant 0 : index
    %c0_0 = arith.constant 0 : index
    %0 = vector.load %arg2[%c0, %c0_0] : memref<1024x128xbf16, #tpu.memory_space<vmem>>, vector<1024x128xbf16>
    %c0_1 = arith.constant 0 : index
    %c0_2 = arith.constant 0 : index
    %1 = vector.load %arg3[%c0_1, %c0_2] : memref<1x128xf32, #tpu.memory_space<vmem>>, vector<1x128xf32>
    %c0_3 = arith.constant 0 : index
    %c0_4 = arith.constant 0 : index
    %2 = vector.load %arg4[%c0_3, %c0_4] : memref<128x128xbf16, #tpu.memory_space<vmem>>, vector<128x128xbf16>
    %c0_5 = arith.constant 0 : index
    %c0_6 = arith.constant 0 : index
    %3 = vector.load %arg5[%c0_5, %c0_6] : memref<1x128xf32, #tpu.memory_space<vmem>>, vector<1x128xf32>
    %c0_7 = arith.constant 0 : index
    %c0_8 = arith.constant 0 : index
    %4 = vector.load %arg0[%c0_7, %c0_8] : memref<2x1024xf32, #tpu.memory_space<vmem>>, vector<2x1024xf32>
    %5 = arith.truncf %4 : vector<2x1024xf32> to vector<2x1024xbf16>
    %cst = arith.constant dense<0.000000e+00> : vector<2x128xf32>
    %6 = tpu.matmul %5, %0, %cst {dimension_numbers = #tpu.dot_dimension_numbers<[1], [0], [0], [1], [0, 0, 1, 1], [], []>} : vector<2x1024xbf16>, vector<1024x128xbf16>, vector<2x128xf32> -> vector<2x128xf32>
    %7 = vector.broadcast %1 : vector<1x128xf32> to vector<2x128xf32>
    %8 = arith.addf %6, %7 : vector<2x128xf32>
    %cst_9 = arith.constant 5.000000e-01 : f32
    %9 = vector.broadcast %cst_9 : f32 to vector<2x128xf32>
    %10 = arith.mulf %9, %8 : vector<2x128xf32>
    %cst_10 = arith.constant 0.707106769 : f32
    %11 = vector.broadcast %cst_10 : f32 to vector<2x128xf32>
    %12 = arith.mulf %8, %11 : vector<2x128xf32>
    %13 = math.absf %12 : vector<2x128xf32>
    %cst_11 = arith.constant 0.327591091 : f32
    %14 = vector.broadcast %cst_11 : f32 to vector<2x128xf32>
    %15 = arith.mulf %14, %13 : vector<2x128xf32>
    %cst_12 = arith.constant 1.000000e+00 : f32
    %16 = vector.broadcast %cst_12 : f32 to vector<2x128xf32>
    %17 = arith.addf %16, %15 : vector<2x128xf32>
    %cst_13 = arith.constant 1.000000e+00 : f32
    %18 = vector.broadcast %cst_13 : f32 to vector<2x128xf32>
    %19 = arith.divf %18, %17 : vector<2x128xf32>
    %cst_14 = arith.constant 1.06140542 : f32
    %20 = vector.broadcast %cst_14 : f32 to vector<2x128xf32>
    %21 = arith.mulf %20, %19 : vector<2x128xf32>
    %cst_15 = arith.constant -1.45315206 : f32
    %22 = vector.broadcast %cst_15 : f32 to vector<2x128xf32>
    %23 = arith.addf %21, %22 : vector<2x128xf32>
    %24 = arith.mulf %23, %19 : vector<2x128xf32>
    %cst_16 = arith.constant 1.42141378 : f32
    %25 = vector.broadcast %cst_16 : f32 to vector<2x128xf32>
    %26 = arith.addf %24, %25 : vector<2x128xf32>
    %27 = arith.mulf %26, %19 : vector<2x128xf32>
    %cst_17 = arith.constant -0.284496725 : f32
    %28 = vector.broadcast %cst_17 : f32 to vector<2x128xf32>
    %29 = arith.addf %27, %28 : vector<2x128xf32>
    %30 = arith.mulf %29, %19 : vector<2x128xf32>
    %cst_18 = arith.constant 0.254829586 : f32
    %31 = vector.broadcast %cst_18 : f32 to vector<2x128xf32>
    %32 = arith.addf %30, %31 : vector<2x128xf32>
    %33 = arith.mulf %32, %19 : vector<2x128xf32>
    %cst_19 = arith.constant 0.000000e+00 : f32
    %34 = vector.broadcast %cst_19 : f32 to vector<2x128xf32>
    %35 = arith.subf %34, %13 : vector<2x128xf32>
    %36 = arith.mulf %35, %13 : vector<2x128xf32>
    %37 = math.exp %36 : vector<2x128xf32>
    %38 = arith.mulf %33, %37 : vector<2x128xf32>
    %cst_20 = arith.constant 1.000000e+00 : f32
    %39 = vector.broadcast %cst_20 : f32 to vector<2x128xf32>
    %40 = arith.subf %39, %38 : vector<2x128xf32>
    %cst_21 = arith.constant 0.000000e+00 : f32
    %41 = vector.broadcast %cst_21 : f32 to vector<2x128xf32>
    %42 = arith.cmpf olt, %12, %41 : vector<2x128xf32>
    %cst_22 = arith.constant 0.000000e+00 : f32
    %43 = vector.broadcast %cst_22 : f32 to vector<2x128xf32>
    %44 = arith.subf %43, %40 : vector<2x128xf32>
    %45 = arith.select %42, %44, %40 : vector<2x128xi1>, vector<2x128xf32>
    %cst_23 = arith.constant 1.000000e+00 : f32
    %46 = vector.broadcast %cst_23 : f32 to vector<2x128xf32>
    %47 = arith.addf %46, %45 : vector<2x128xf32>
    %48 = arith.mulf %10, %47 : vector<2x128xf32>
    %49 = arith.truncf %48 : vector<2x128xf32> to vector<2x128xbf16>
    %cst_24 = arith.constant dense<0.000000e+00> : vector<2x128xf32>
    %50 = tpu.matmul %49, %2, %cst_24 {dimension_numbers = #tpu.dot_dimension_numbers<[1], [0], [0], [1], [0, 0, 1, 1], [], []>} : vector<2x128xbf16>, vector<128x128xbf16>, vector<2x128xf32> -> vector<2x128xf32>
    %51 = vector.broadcast %3 : vector<1x128xf32> to vector<2x128xf32>
    %52 = arith.addf %50, %51 : vector<2x128xf32>
    %c0_25 = arith.constant 0 : index
    %c0_26 = arith.constant 0 : index
    %c0_27 = arith.constant 0 : index
    %53 = vector.load %arg6[%c0_25, %c0_26, %c0_27] : memref<2x2x128xf32, #tpu.memory_space<vmem>>, vector<1x2x128xf32>
    %54 = vector.shape_cast %53 : vector<1x2x128xf32> to vector<2x128xf32>
    %55 = vector.shape_cast %52 : vector<2x128xf32> to vector<1x2x128xf32>
    tpu.vector_store %arg6[%c0_25, %c0_26, %c0_27], %55 {strides = array<i32>} : memref<2x2x128xf32, #tpu.memory_space<vmem>>, vector<1x2x128xf32>,
    %c0_28 = arith.constant 0 : index
    %c0_29 = arith.constant 0 : index
    %56 = vector.load %arg1[%c0_28, %c0_29] : memref<2x1024xf32, #tpu.memory_space<vmem>>, vector<2x1024xf32>
    %57 = arith.truncf %56 : vector<2x1024xf32> to vector<2x1024xbf16>
    %cst_30 = arith.constant dense<0.000000e+00> : vector<2x128xf32>
    %58 = tpu.matmul %57, %0, %cst_30 {dimension_numbers = #tpu.dot_dimension_numbers<[1], [0], [0], [1], [0, 0, 1, 1], [], []>} : vector<2x1024xbf16>, vector<1024x128xbf16>, vector<2x128xf32> -> vector<2x128xf32>
    %59 = vector.broadcast %1 : vector<1x128xf32> to vector<2x128xf32>
    %60 = arith.addf %58, %59 : vector<2x128xf32>
    %cst_31 = arith.constant 5.000000e-01 : f32
    %61 = vector.broadcast %cst_31 : f32 to vector<2x128xf32>
    %62 = arith.mulf %61, %60 : vector<2x128xf32>
    %cst_32 = arith.constant 0.707106769 : f32
    %63 = vector.broadcast %cst_32 : f32 to vector<2x128xf32>
    %64 = arith.mulf %60, %63 : vector<2x128xf32>
    %65 = math.absf %64 : vector<2x128xf32>
    %cst_33 = arith.constant 0.327591091 : f32
    %66 = vector.broadcast %cst_33 : f32 to vector<2x128xf32>
    %67 = arith.mulf %66, %65 : vector<2x128xf32>
    %cst_34 = arith.constant 1.000000e+00 : f32
    %68 = vector.broadcast %cst_34 : f32 to vector<2x128xf32>
    %69 = arith.addf %68, %67 : vector<2x128xf32>
    %cst_35 = arith.constant 1.000000e+00 : f32
    %70 = vector.broadcast %cst_35 : f32 to vector<2x128xf32>
    %71 = arith.divf %70, %69 : vector<2x128xf32>
    %cst_36 = arith.constant 1.06140542 : f32
    %72 = vector.broadcast %cst_36 : f32 to vector<2x128xf32>
    %73 = arith.mulf %72, %71 : vector<2x128xf32>
    %cst_37 = arith.constant -1.45315206 : f32
    %74 = vector.broadcast %cst_37 : f32 to vector<2x128xf32>
    %75 = arith.addf %73, %74 : vector<2x128xf32>
    %76 = arith.mulf %75, %71 : vector<2x128xf32>
    %cst_38 = arith.constant 1.42141378 : f32
    %77 = vector.broadcast %cst_38 : f32 to vector<2x128xf32>
    %78 = arith.addf %76, %77 : vector<2x128xf32>
    %79 = arith.mulf %78, %71 : vector<2x128xf32>
    %cst_39 = arith.constant -0.284496725 : f32
    %80 = vector.broadcast %cst_39 : f32 to vector<2x128xf32>
    %81 = arith.addf %79, %80 : vector<2x128xf32>
    %82 = arith.mulf %81, %71 : vector<2x128xf32>
    %cst_40 = arith.constant 0.254829586 : f32
    %83 = vector.broadcast %cst_40 : f32 to vector<2x128xf32>
    %84 = arith.addf %82, %83 : vector<2x128xf32>
    %85 = arith.mulf %84, %71 : vector<2x128xf32>
    %cst_41 = arith.constant 0.000000e+00 : f32
    %86 = vector.broadcast %cst_41 : f32 to vector<2x128xf32>
    %87 = arith.subf %86, %65 : vector<2x128xf32>
    %88 = arith.mulf %87, %65 : vector<2x128xf32>
    %89 = math.exp %88 : vector<2x128xf32>
    %90 = arith.mulf %85, %89 : vector<2x128xf32>
    %cst_42 = arith.constant 1.000000e+00 : f32
    %91 = vector.broadcast %cst_42 : f32 to vector<2x128xf32>
    %92 = arith.subf %91, %90 : vector<2x128xf32>
    %cst_43 = arith.constant 0.000000e+00 : f32
    %93 = vector.broadcast %cst_43 : f32 to vector<2x128xf32>
    %94 = arith.cmpf olt, %64, %93 : vector<2x128xf32>
    %cst_44 = arith.constant 0.000000e+00 : f32
    %95 = vector.broadcast %cst_44 : f32 to vector<2x128xf32>
    %96 = arith.subf %95, %92 : vector<2x128xf32>
    %97 = arith.select %94, %96, %92 : vector<2x128xi1>, vector<2x128xf32>
    %cst_45 = arith.constant 1.000000e+00 : f32
    %98 = vector.broadcast %cst_45 : f32 to vector<2x128xf32>
    %99 = arith.addf %98, %97 : vector<2x128xf32>
    %100 = arith.mulf %62, %99 : vector<2x128xf32>
    %101 = arith.truncf %100 : vector<2x128xf32> to vector<2x128xbf16>
    %cst_46 = arith.constant dense<0.000000e+00> : vector<2x128xf32>
    %102 = tpu.matmul %101, %2, %cst_46 {dimension_numbers = #tpu.dot_dimension_numbers<[1], [0], [0], [1], [0, 0, 1, 1], [], []>} : vector<2x128xbf16>, vector<128x128xbf16>, vector<2x128xf32> -> vector<2x128xf32>
    %103 = vector.broadcast %3 : vector<1x128xf32> to vector<2x128xf32>
    %104 = arith.addf %102, %103 : vector<2x128xf32>
    %c1 = arith.constant 1 : index
    %c0_47 = arith.constant 0 : index
    %c0_48 = arith.constant 0 : index
    %105 = vector.load %arg6[%c1, %c0_47, %c0_48] : memref<2x2x128xf32, #tpu.memory_space<vmem>>, vector<1x2x128xf32>
    %106 = vector.shape_cast %105 : vector<1x2x128xf32> to vector<2x128xf32>
    %107 = vector.shape_cast %104 : vector<2x128xf32> to vector<1x2x128xf32>
    tpu.vector_store %arg6[%c1, %c0_47, %c0_48], %107 {strides = array<i32>} : memref<2x2x128xf32, #tpu.memory_space<vmem>>, vector<1x2x128xf32>,
    return
  }
}

</mosaic_0001>

<llo_original>
// kernel: siamese_forward.1
$region0: #{siamese_forward.1}
  #allocation0 [shape = 'u32[]', space=smem, size = 0x4, offset = 0x4, fixed_abs, tag = 'smem constant byte address 0x4 - core index']
  #allocation1 [shape = 'u32[144,128]{1,0:T(1,128)}', space=vmem, size = 0x12000, scoped, tag = 'internal scratch']
  %s0 = inlined_call_operand.vmem [shape: f32[2,1024], index: 0, kind: input, shape index: {}]
  %s1 = inlined_call_operand.vmem [shape: f32[2,1024], index: 1, kind: input, shape index: {}]
  %s2 = inlined_call_operand.hbm [shape: bf16[1024,128], index: 2, kind: input, shape index: {}]
  %s3 = inlined_call_operand.vmem [shape: f32[1,128], index: 3, kind: input, shape index: {}]
  %s4 = inlined_call_operand.vmem [shape: bf16[128,128], index: 4, kind: input, shape index: {}]
  %s5 = inlined_call_operand.vmem [shape: f32[1,128], index: 5, kind: input, shape index: {}]
  %s6 = inlined_call_operand.vmem [shape: f32[2,2,128], index: 6, kind: output, shape index: {}]
  %s7 = sld [smem:[#allocation0]]
  $region38: #{siamese_forward.1} parent=0
    _
  %s9 = ssub.s32 1, %s7
  %s10 = scalar_select 0, %s9, %s7
  $region1: #{siamese_forward.1} parent=0
    #allocation2 [shape = 'u8[262144]{0}', space=vmem, size = 0x40000, scoped, tag = 'input window, operand 2, single buffered']
    #allocation3 [shape = 's32[1]{0}', space=sflag, size = 0x4, scoped, tag = 'scoped memory for siamese_forward.1']
    %11 = vsyncpa [#allocation3], 0
    // Predicated region
    $region2: #{siamese_forward.1} parent=1 // pred_check
      _
    $region3: #{siamese_forward.1} parent=1 // pred_check_branch
      %13 = sbr.rel (0) target = $region5
    $region4: #{siamese_forward.1} parent=1 // pred_region
      _
    $region5: #{siamese_forward.1} parent=1 // pred_fallthru
      _
    // Predicated region
    $region6: #{siamese_forward.1} parent=1 // pred_check
      _
    $region7: #{siamese_forward.1} parent=1 // pred_check_branch
      %15 = sbr.rel (0) target = $region9
    $region8: #{siamese_forward.1} parent=1 // pred_region
      _
    $region9: #{siamese_forward.1} parent=1 // pred_fallthru
      _
    // Predicated region
    $region10: #{siamese_forward.1} parent=1 // pred_check
      _
    $region11: #{siamese_forward.1} parent=1 // pred_check_branch
      %17 = sbr.rel (0) target = $region13
    $region12: #{siamese_forward.1} parent=1 // pred_region
      %s19 = ssub.s32 8192, 8192
      %20 = vsyncadd [#allocation3], %s19
      %s21 = sshll.u32 [#allocation2], 4
      %s22 = int_to_ptr.vmem [resolvable:$true] %s21
      %27 = dma.hbm_to_vmem [thread:$0]  %s2, 8192, %s22, [#allocation3], 64, 64, 4
    $region13: #{siamese_forward.1} parent=1 // pred_fallthru
      _
    // Predicated region
    $region14: #{siamese_forward.1} parent=1 // pred_check
      _
    $region15: #{siamese_forward.1} parent=1 // pred_check_branch
      %29 = sbr.rel (0) target = $region17
    $region16: #{siamese_forward.1} parent=1 // pred_region
      _
    $region17: #{siamese_forward.1} parent=1 // pred_fallthru
      _
    // Predicated region
    $region18: #{siamese_forward.1} parent=1 // pred_check
      _
    $region19: #{siamese_forward.1} parent=1 // pred_check_branch
      %31 = sbr.rel (0) target = $region21
    $region20: #{siamese_forward.1} parent=1 // pred_region
      _
    $region21: #{siamese_forward.1} parent=1 // pred_fallthru
      _
    // Predicated region
    $region22: #{siamese_forward.1} parent=1 // pred_check
      _
    $region23: #{siamese_forward.1} parent=1 // pred_check_branch
      %33 = sbr.rel (0) target = $region25
    $region24: #{siamese_forward.1} parent=1 // pred_region
      _
    $region25: #{siamese_forward.1} parent=1 // pred_fallthru
      _
    // Predicated region
    $region26: #{siamese_forward.1} parent=1 // pred_check
      _
    $region27: #{siamese_forward.1} parent=1 // pred_check_branch
      %35 = sbr.rel (0) target = $region29
    $region28: #{siamese_forward.1} parent=1 // pred_region
      %36 = dma.done [#allocation3], 8192
    $region29: #{siamese_forward.1} parent=1 // pred_fallthru
      _
    %v38 = vld [vmem:[#allocation2] sm:$0xf]
    %v39 = vld [vmem:[#allocation2 + $0x4] sm:$0xf]
    %v40 = vld [vmem:[#allocation2 + $0x8] sm:$0xf]
    %v41 = vld [vmem:[#allocation2 + $0xc] sm:$0xf]
    %v42 = vld [vmem:[#allocation2 + $0x10] sm:$0xf]
    %v43 = vld [vmem:[#allocation2 + $0x14] sm:$0xf]
    %v44 = vld [vmem:[#allocation2 + $0x18] sm:$0xf]
    %v45 = vld [vmem:[#allocation2 + $0x1c] sm:$0xf]
    %v46 = vld [vmem:[#allocation2 + $0x20] sm:$0xf]
    %v47 = vld [vmem:[#allocation2 + $0x24] sm:$0xf]
    %v48 = vld [vmem:[#allocation2 + $0x28] sm:$0xf]
    %v49 = vld [vmem:[#allocation2 + $0x2c] sm:$0xf]
    %v50 = vld [vmem:[#allocation2 + $0x30] sm:$0xf]
    %v51 = vld [vmem:[#allocation2 + $0x34] sm:$0xf]
    %v52 = vld [vmem:[#allocation2 + $0x38] sm:$0xf]
    %v53 = vld [vmem:[#allocation2 + $0x3c] sm:$0xf]
    %v54 = vld [vmem:[#allocation2 + $0x40] sm:$0xf]
    %v55 = vld [vmem:[#allocation2 + $0x44] sm:$0xf]
    %v56 = vld [vmem:[#allocation2 + $0x48] sm:$0xf]
    %v57 = vld [vmem:[#allocation2 + $0x4c] sm:$0xf]
    %v58 = vld [vmem:[#allocation2 + $0x50] sm:$0xf]
    %v59 = vld [vmem:[#allocation2 + $0x54] sm:$0xf]
    %v60 = vld [vmem:[#allocation2 + $0x58] sm:$0xf]
    %v61 = vld [vmem:[#allocation2 + $0x5c] sm:$0xf]
    %v62 = vld [vmem:[#allocation2 + $0x60] sm:$0xf]
    %v63 = vld [vmem:[#allocation2 + $0x64] sm:$0xf]
    %v64 = vld [vmem:[#allocation2 + $0x68] sm:$0xf]
    %v65 = vld [vmem:[#allocation2 + $0x6c] sm:$0xf]
    %v66 = vld [vmem:[#allocation2 + $0x70] sm:$0xf]
    %v67 = vld [vmem:[#allocation2 + $0x74] sm:$0xf]
    %v68 = vld [vmem:[#allocation2 + $0x78] sm:$0xf]
    %v69 = vld [vmem:[#allocation2 + $0x7c] sm:$0xf]
    %v70 = vld [vmem:[#allocation2 + $0x80] sm:$0xf]
    %v71 = vld [vmem:[#allocation2 + $0x84] sm:$0xf]
    %v72 = vld [vmem:[#allocation2 + $0x88] sm:$0xf]
    %v73 = vld [vmem:[#allocation2 + $0x8c] sm:$0xf]
    %v74 = vld [vmem:[#allocation2 + $0x90] sm:$0xf]
    %v75 = vld [vmem:[#allocation2 + $0x94] sm:$0xf]
    %v76 = vld [vmem:[#allocation2 + $0x98] sm:$0xf]
    %v77 = vld [vmem:[#allocation2 + $0x9c] sm:$0xf]
    %v78 = vld [vmem:[#allocation2 + $0xa0] sm:$0xf]
    %v79 = vld [vmem:[#allocation2 + $0xa4] sm:$0xf]
    %v80 = vld [vmem:[#allocation2 + $0xa8] sm:$0xf]
    %v81 = vld [vmem:[#allocation2 + $0xac] sm:$0xf]
    %v82 = vld [vmem:[#allocation2 + $0xb0] sm:$0xf]
    %v83 = vld [vmem:[#allocation2 + $0xb4] sm:$0xf]
    %v84 = vld [vmem:[#allocation2 + $0xb8] sm:$0xf]
    %v85 = vld [vmem:[#allocation2 + $0xbc] sm:$0xf]
    %v86 = vld [vmem:[#allocation2 + $0xc0] sm:$0xf]
    %v87 = vld [vmem:[#allocation2 + $0xc4] sm:$0xf]
    %v88 = vld [vmem:[#allocation2 + $0xc8] sm:$0xf]
    %v89 = vld [vmem:[#allocation2 + $0xcc] sm:$0xf]
    %v90 = vld [vmem:[#allocation2 + $0xd0] sm:$0xf]
    %v91 = vld [vmem:[#allocation2 + $0xd4] sm:$0xf]
    %v92 = vld [vmem:[#allocation2 + $0xd8] sm:$0xf]
    %v93 = vld [vmem:[#allocation2 + $0xdc] sm:$0xf]
    %v94 = vld [vmem:[#allocation2 + $0xe0] sm:$0xf]
    %v95 = vld [vmem:[#allocation2 + $0xe4] sm:$0xf]
    %v96 = vld [vmem:[#allocation2 + $0xe8] sm:$0xf]
    %v97 = vld [vmem:[#allocation2 + $0xec] sm:$0xf]
    %v98 = vld [vmem:[#allocation2 + $0xf0] sm:$0xf]
    %v99 = vld [vmem:[#allocation2 + $0xf4] sm:$0xf]
    %v100 = vld [vmem:[#allocation2 + $0xf8] sm:$0xf]
    %v101 = vld [vmem:[#allocation2 + $0xfc] sm:$0xf]
    %v102 = vld [vmem:[#allocation2 + $0x100] sm:$0xf]
    %v103 = vld [vmem:[#allocation2 + $0x104] sm:$0xf]
    %v104 = vld [vmem:[#allocation2 + $0x108] sm:$0xf]
    %v105 = vld [vmem:[#allocation2 + $0x10c] sm:$0xf]
    %v106 = vld [vmem:[#allocation2 + $0x110] sm:$0xf]
    %v107 = vld [vmem:[#allocation2 + $0x114] sm:$0xf]
    %v108 = vld [vmem:[#allocation2 + $0x118] sm:$0xf]
    %v109 = vld [vmem:[#allocation2 + $0x11c] sm:$0xf]
    %v110 = vld [vmem:[#allocation2 + $0x120] sm:$0xf]
    %v111 = vld [vmem:[#allocation2 + $0x124] sm:$0xf]
    %v112 = vld [vmem:[#allocation2 + $0x128] sm:$0xf]
    %v113 = vld [vmem:[#allocation2 + $0x12c] sm:$0xf]
    %v114 = vld [vmem:[#allocation2 + $0x130] sm:$0xf]
    %v115 = vld [vmem:[#allocation2 + $0x134] sm:$0xf]
    %v116 = vld [vmem:[#allocation2 + $0x138] sm:$0xf]
    %v117 = vld [vmem:[#allocation2 + $0x13c] sm:$0xf]
    %v118 = vld [vmem:[#allocation2 + $0x140] sm:$0xf]
    %v119 = vld [vmem:[#allocation2 + $0x144] sm:$0xf]
    %v120 = vld [vmem:[#allocation2 + $0x148] sm:$0xf]
    %v121 = vld [vmem:[#allocation2 + $0x14c] sm:$0xf]
    %v122 = vld [vmem:[#allocation2 + $0x150] sm:$0xf]
    %v123 = vld [vmem:[#allocation2 + $0x154] sm:$0xf]
    %v124 = vld [vmem:[#allocation2 + $0x158] sm:$0xf]
    %v125 = vld [vmem:[#allocation2 + $0x15c] sm:$0xf]
    %v126 = vld [vmem:[#allocation2 + $0x160] sm:$0xf]
    %v127 = vld [vmem:[#allocation2 + $0x164] sm:$0xf]
    %v128 = vld [vmem:[#allocation2 + $0x168] sm:$0xf]
    %v129 = vld [vmem:[#allocation2 + $0x16c] sm:$0xf]
    %v130 = vld [vmem:[#allocation2 + $0x170] sm:$0xf]
    %v131 = vld [vmem:[#allocation2 + $0x174] sm:$0xf]
    %v132 = vld [vmem:[#allocation2 + $0x178] sm:$0xf]
    %v133 = vld [vmem:[#allocation2 + $0x17c] sm:$0xf]
    %v134 = vld [vmem:[#allocation2 + $0x180] sm:$0xf]
    %v135 = vld [vmem:[#allocation2 + $0x184] sm:$0xf]
    %v136 = vld [vmem:[#allocation2 + $0x188] sm:$0xf]
    %v137 = vld [vmem:[#allocation2 + $0x18c] sm:$0xf]
    %v138 = vld [vmem:[#allocation2 + $0x190] sm:$0xf]
    %v139 = vld [vmem:[#allocation2 + $0x194] sm:$0xf]
    %v140 = vld [vmem:[#allocation2 + $0x198] sm:$0xf]
    %v141 = vld [vmem:[#allocation2 + $0x19c] sm:$0xf]
    %v142 = vld [vmem:[#allocation2 + $0x1a0] sm:$0xf]
    %v143 = vld [vmem:[#allocation2 + $0x1a4] sm:$0xf]
    %v144 = vld [vmem:[#allocation2 + $0x1a8] sm:$0xf]
    %v145 = vld [vmem:[#allocation2 + $0x1ac] sm:$0xf]
    %v146 = vld [vmem:[#allocation2 + $0x1b0] sm:$0xf]
    %v147 = vld [vmem:[#allocation2 + $0x1b4] sm:$0xf]
    %v148 = vld [vmem:[#allocation2 + $0x1b8] sm:$0xf]
    %v149 = vld [vmem:[#allocation2 + $0x1bc] sm:$0xf]
    %v150 = vld [vmem:[#allocation2 + $0x1c0] sm:$0xf]
    %v151 = vld [vmem:[#allocation2 + $0x1c4] sm:$0xf]
    %v152 = vld [vmem:[#allocation2 + $0x1c8] sm:$0xf]
    %v153 = vld [vmem:[#allocation2 + $0x1cc] sm:$0xf]
    %v154 = vld [vmem:[#allocation2 + $0x1d0] sm:$0xf]
    %v155 = vld [vmem:[#allocation2 + $0x1d4] sm:$0xf]
    %v156 = vld [vmem:[#allocation2 + $0x1d8] sm:$0xf]
    %v157 = vld [vmem:[#allocation2 + $0x1dc] sm:$0xf]
    %v158 = vld [vmem:[#allocation2 + $0x1e0] sm:$0xf]
    %v159 = vld [vmem:[#allocation2 + $0x1e4] sm:$0xf]
    %v160 = vld [vmem:[#allocation2 + $0x1e8] sm:$0xf]
    %v161 = vld [vmem:[#allocation2 + $0x1ec] sm:$0xf]
    %v162 = vld [vmem:[#allocation2 + $0x1f0] sm:$0xf]
    %v163 = vld [vmem:[#allocation2 + $0x1f4] sm:$0xf]
    %v164 = vld [vmem:[#allocation2 + $0x1f8] sm:$0xf]
    %v165 = vld [vmem:[#allocation2 + $0x1fc] sm:$0xf]
    %v166 = vld [vmem:[%s3] sm:$0x1]
    %v167 = vld [vmem:[%s4] sm:$0xf]
    %v168 = vld [vmem:[%s4 + $0x4] sm:$0xf]
    %v169 = vld [vmem:[%s4 + $0x8] sm:$0xf]
    %v170 = vld [vmem:[%s4 + $0xc] sm:$0xf]
    %v171 = vld [vmem:[%s4 + $0x10] sm:$0xf]
    %v172 = vld [vmem:[%s4 + $0x14] sm:$0xf]
    %v173 = vld [vmem:[%s4 + $0x18] sm:$0xf]
    %v174 = vld [vmem:[%s4 + $0x1c] sm:$0xf]
    %v175 = vld [vmem:[%s4 + $0x20] sm:$0xf]
    %v176 = vld [vmem:[%s4 + $0x24] sm:$0xf]
    %v177 = vld [vmem:[%s4 + $0x28] sm:$0xf]
    %v178 = vld [vmem:[%s4 + $0x2c] sm:$0xf]
    %v179 = vld [vmem:[%s4 + $0x30] sm:$0xf]
    %v180 = vld [vmem:[%s4 + $0x34] sm:$0xf]
    %v181 = vld [vmem:[%s4 + $0x38] sm:$0xf]
    %v182 = vld [vmem:[%s4 + $0x3c] sm:$0xf]
    %v183 = vld [vmem:[%s5] sm:$0x1]
    %v184 = vld [vmem:[%s0] sm:$0xff]
    %v185 = vld [vmem:[%s0 + $0x8] sm:$0xff]
    %v188 = vcombine.high %v184, %v184
    %v190 = vunpack.c.l.s4 1983009808
    %v191 = vunpack.c.0.s8 %v190
    %v192 = vlaneseq
    %v193 = vshrl.u32 %v192, 7
    %v194 = vsub.s32 %v191, %v193
    %v195 = vrot.slane %v184, %v194
    %v197 = vunpack.c.l.s4 1983009808
    %v198 = vunpack.c.0.s8 %v197
    %v199 = vlaneseq
    %v200 = vshrl.u32 %v199, 7
    %v201 = vsub.s32 %v198, %v200
    %v202 = vrot.slane %v188, %v201
    %v203 = vcombine.high %v195, %v195
    %v204 = vcombine.high %v202, %v202
    %v205 = vcombine.high %v185, %v185
    %v207 = vunpack.c.l.s4 1983009808
    %v208 = vunpack.c.0.s8 %v207
    %v209 = vlaneseq
    %v210 = vshrl.u32 %v209, 7
    %v211 = vsub.s32 %v208, %v210
    %v212 = vrot.slane %v185, %v211
    %v214 = vunpack.c.l.s4 1983009808
    %v215 = vunpack.c.0.s8 %v214
    %v216 = vlaneseq
    %v217 = vshrl.u32 %v216, 7
    %v218 = vsub.s32 %v215, %v217
    %v219 = vrot.slane %v205, %v218
    %v220 = vcombine.high %v212, %v212
    %v221 = vcombine.high %v219, %v219
    %v230 = vpack.c.bf16 %v195, %v195
    %v231 = vpack.c.bf16 %v203, %v203
    %v232 = vpack.c.bf16 %v202, %v202
    %v233 = vpack.c.bf16 %v204, %v204
    %v234 = vpack.c.bf16 %v212, %v212
    %v235 = vpack.c.bf16 %v220, %v220
    %v236 = vpack.c.bf16 %v219, %v219
    %v237 = vpack.c.bf16 %v221, %v221
    %v239 = vlaneseq
    %v240 = vshrl.u32 %v239, 7
    %v241 = vsub.s32 0, %v240
    %v242 = vrot.slane %v166, %v241
    %v372 = vunpack.c.l.b16 %v38
    %v373 = vunpack.c.l.b16 %v39
    %v374 = vunpack.c.l.b16 %v40
    %v375 = vunpack.c.l.b16 %v41
    %v376 = vunpack.c.l.b16 %v42
    %v377 = vunpack.c.l.b16 %v43
    %v378 = vunpack.c.l.b16 %v44
    %v379 = vunpack.c.l.b16 %v45
    %v380 = vunpack.c.l.b16 %v46
    %v381 = vunpack.c.l.b16 %v47
    %v382 = vunpack.c.l.b16 %v48
    %v383 = vunpack.c.l.b16 %v49
    %v384 = vunpack.c.l.b16 %v50
    %v385 = vunpack.c.l.b16 %v51
    %v386 = vunpack.c.l.b16 %v52
    %v387 = vunpack.c.l.b16 %v53
    %v388 = vunpack.c.l.b16 %v54
    %v389 = vunpack.c.l.b16 %v55
    %v390 = vunpack.c.l.b16 %v56
    %v391 = vunpack.c.l.b16 %v57
    %v392 = vunpack.c.l.b16 %v58
    %v393 = vunpack.c.l.b16 %v59
    %v394 = vunpack.c.l.b16 %v60
    %v395 = vunpack.c.l.b16 %v61
    %v396 = vunpack.c.l.b16 %v62
    %v397 = vunpack.c.l.b16 %v63
    %v398 = vunpack.c.l.b16 %v64
    %v399 = vunpack.c.l.b16 %v65
    %v400 = vunpack.c.l.b16 %v66
    %v401 = vunpack.c.l.b16 %v67
    %v402 = vunpack.c.l.b16 %v68
    %v403 = vunpack.c.l.b16 %v69
    %v404 = vunpack.c.l.b16 %v70
    %v405 = vunpack.c.l.b16 %v71
    %v406 = vunpack.c.l.b16 %v72
    %v407 = vunpack.c.l.b16 %v73
    %v408 = vunpack.c.l.b16 %v74
    %v409 = vunpack.c.l.b16 %v75
    %v410 = vunpack.c.l.b16 %v76
    %v411 = vunpack.c.l.b16 %v77
    %v412 = vunpack.c.l.b16 %v78
    %v413 = vunpack.c.l.b16 %v79
    %v414 = vunpack.c.l.b16 %v80
    %v415 = vunpack.c.l.b16 %v81
    %v416 = vunpack.c.l.b16 %v82
    %v417 = vunpack.c.l.b16 %v83
    %v418 = vunpack.c.l.b16 %v84
    %v419 = vunpack.c.l.b16 %v85
    %v420 = vunpack.c.l.b16 %v86
    %v421 = vunpack.c.l.b16 %v87
    %v422 = vunpack.c.l.b16 %v88
    %v423 = vunpack.c.l.b16 %v89
    %v424 = vunpack.c.l.b16 %v90
    %v425 = vunpack.c.l.b16 %v91
    %v426 = vunpack.c.l.b16 %v92
    %v427 = vunpack.c.l.b16 %v93
    %v428 = vunpack.c.l.b16 %v94
    %v429 = vunpack.c.l.b16 %v95
    %v430 = vunpack.c.l.b16 %v96
    %v431 = vunpack.c.l.b16 %v97
    %v432 = vunpack.c.l.b16 %v98
    %v433 = vunpack.c.l.b16 %v99
    %v434 = vunpack.c.l.b16 %v100
    %v435 = vunpack.c.l.b16 %v101
    %v436 = vunpack.c.l.b16 %v102
    %v437 = vunpack.c.l.b16 %v103
    %v438 = vunpack.c.l.b16 %v104
    %v439 = vunpack.c.l.b16 %v105
    %v440 = vunpack.c.l.b16 %v106
    %v441 = vunpack.c.l.b16 %v107
    %v442 = vunpack.c.l.b16 %v108
    %v443 = vunpack.c.l.b16 %v109
    %v444 = vunpack.c.l.b16 %v110
    %v445 = vunpack.c.l.b16 %v111
    %v446 = vunpack.c.l.b16 %v112
    %v447 = vunpack.c.l.b16 %v113
    %v448 = vunpack.c.l.b16 %v114
    %v449 = vunpack.c.l.b16 %v115
    %v450 = vunpack.c.l.b16 %v116
    %v451 = vunpack.c.l.b16 %v117
    %v452 = vunpack.c.l.b16 %v118
    %v453 = vunpack.c.l.b16 %v119
    %v454 = vunpack.c.l.b16 %v120
    %v455 = vunpack.c.l.b16 %v121
    %v456 = vunpack.c.l.b16 %v122
    %v457 = vunpack.c.l.b16 %v123
    %v458 = vunpack.c.l.b16 %v124
    %v459 = vunpack.c.l.b16 %v125
    %v460 = vunpack.c.l.b16 %v126
    %v461 = vunpack.c.l.b16 %v127
    %v462 = vunpack.c.l.b16 %v128
    %v463 = vunpack.c.l.b16 %v129
    %v464 = vunpack.c.l.b16 %v130
    %v465 = vunpack.c.l.b16 %v131
    %v466 = vunpack.c.l.b16 %v132
    %v467 = vunpack.c.l.b16 %v133
    %v468 = vunpack.c.l.b16 %v134
    %v469 = vunpack.c.l.b16 %v135
    %v470 = vunpack.c.l.b16 %v136
    %v471 = vunpack.c.l.b16 %v137
    %v472 = vunpack.c.l.b16 %v138
    %v473 = vunpack.c.l.b16 %v139
    %v474 = vunpack.c.l.b16 %v140
    %v475 = vunpack.c.l.b16 %v141
    %v476 = vunpack.c.l.b16 %v142
    %v477 = vunpack.c.l.b16 %v143
    %v478 = vunpack.c.l.b16 %v144
    %v479 = vunpack.c.l.b16 %v145
    %v480 = vunpack.c.l.b16 %v146
    %v481 = vunpack.c.l.b16 %v147
    %v482 = vunpack.c.l.b16 %v148
    %v483 = vunpack.c.l.b16 %v149
    %v484 = vunpack.c.l.b16 %v150
    %v485 = vunpack.c.l.b16 %v151
    %v486 = vunpack.c.l.b16 %v152
    %v487 = vunpack.c.l.b16 %v153
    %v488 = vunpack.c.l.b16 %v154
    %v489 = vunpack.c.l.b16 %v155
    %v490 = vunpack.c.l.b16 %v156
    %v491 = vunpack.c.l.b16 %v157
    %v492 = vunpack.c.l.b16 %v158
    %v493 = vunpack.c.l.b16 %v159
    %v494 = vunpack.c.l.b16 %v160
    %v495 = vunpack.c.l.b16 %v161
    %v496 = vunpack.c.l.b16 %v162
    %v497 = vunpack.c.l.b16 %v163
    %v498 = vunpack.c.l.b16 %v164
    %v499 = vunpack.c.l.b16 %v165
    %v500 = vpack.c.b16 %v373, %v372
    %v501 = vpack.c.b16 %v375, %v374
    %v502 = vpack.c.b16 %v377, %v376
    %v503 = vpack.c.b16 %v379, %v378
    %v504 = vpack.c.b16 %v381, %v380
    %v505 = vpack.c.b16 %v383, %v382
    %v506 = vpack.c.b16 %v385, %v384
    %v507 = vpack.c.b16 %v387, %v386
    %v508 = vpack.c.b16 %v389, %v388
    %v509 = vpack.c.b16 %v391, %v390
    %v510 = vpack.c.b16 %v393, %v392
    %v511 = vpack.c.b16 %v395, %v394
    %v512 = vpack.c.b16 %v397, %v396
    %v513 = vpack.c.b16 %v399, %v398
    %v514 = vpack.c.b16 %v401, %v400
    %v515 = vpack.c.b16 %v403, %v402
    %v516 = vpack.c.b16 %v405, %v404
    %v517 = vpack.c.b16 %v407, %v406
    %v518 = vpack.c.b16 %v409, %v408
    %v519 = vpack.c.b16 %v411, %v410
    %v520 = vpack.c.b16 %v413, %v412
    %v521 = vpack.c.b16 %v415, %v414
    %v522 = vpack.c.b16 %v417, %v416
    %v523 = vpack.c.b16 %v419, %v418
    %v524 = vpack.c.b16 %v421, %v420
    %v525 = vpack.c.b16 %v423, %v422
    %v526 = vpack.c.b16 %v425, %v424
    %v527 = vpack.c.b16 %v427, %v426
    %v528 = vpack.c.b16 %v429, %v428
    %v529 = vpack.c.b16 %v431, %v430
    %v530 = vpack.c.b16 %v433, %v432
    %v531 = vpack.c.b16 %v435, %v434
    %v532 = vpack.c.b16 %v437, %v436
    %v533 = vpack.c.b16 %v439, %v438
    %v534 = vpack.c.b16 %v441, %v440
    %v535 = vpack.c.b16 %v443, %v442
    %v536 = vpack.c.b16 %v445, %v444
    %v537 = vpack.c.b16 %v447, %v446
    %v538 = vpack.c.b16 %v449, %v448
    %v539 = vpack.c.b16 %v451, %v450
    %v540 = vpack.c.b16 %v453, %v452
    %v541 = vpack.c.b16 %v455, %v454
    %v542 = vpack.c.b16 %v457, %v456
    %v543 = vpack.c.b16 %v459, %v458
    %v544 = vpack.c.b16 %v461, %v460
    %v545 = vpack.c.b16 %v463, %v462
    %v546 = vpack.c.b16 %v465, %v464
    %v547 = vpack.c.b16 %v467, %v466
    %v548 = vpack.c.b16 %v469, %v468
    %v549 = vpack.c.b16 %v471, %v470
    %v550 = vpack.c.b16 %v473, %v472
    %v551 = vpack.c.b16 %v475, %v474
    %v552 = vpack.c.b16 %v477, %v476
    %v553 = vpack.c.b16 %v479, %v478
    %v554 = vpack.c.b16 %v481, %v480
    %v555 = vpack.c.b16 %v483, %v482
    %v556 = vpack.c.b16 %v485, %v484
    %v557 = vpack.c.b16 %v487, %v486
    %v558 = vpack.c.b16 %v489, %v488
    %v559 = vpack.c.b16 %v491, %v490
    %v560 = vpack.c.b16 %v493, %v492
    %v561 = vpack.c.b16 %v495, %v494
    %v562 = vpack.c.b16 %v497, %v496
    %v563 = vpack.c.b16 %v499, %v498
    %628 = vmatprep.subr.bf16.mxu0 0
    %629 = vmatpush1.bf16.msra.mxu0 %v500
    %630 = vmatprep.subr.bf16.mxu0 0
    %631 = vmatpush1.bf16.msra.mxu0 %v501
    %632 = vmatprep.subr.bf16.mxu0 0
    %633 = vmatpush1.bf16.msra.mxu0 %v502
    %634 = vmatprep.subr.bf16.mxu0 0
    %635 = vmatpush1.bf16.msra.mxu0 %v503
    %636 = vmatprep.subr.bf16.mxu0 0
    %637 = vmatpush1.bf16.msra.mxu0 %v504
    %638 = vmatprep.subr.bf16.mxu0 0
    %639 = vmatpush1.bf16.msra.mxu0 %v505
    %640 = vmatprep.subr.bf16.mxu0 0
    %641 = vmatpush1.bf16.msra.mxu0 %v506
    %642 = vmatprep.subr.bf16.mxu0 0
    %643 = vmatpush1.bf16.msra.mxu0 %v507
    %644 = vmatprep.subr.bf16.mxu0 0
    %645 = vmatpush1.bf16.msra.mxu0 %v508
    %646 = vmatprep.subr.bf16.mxu0 0
    %647 = vmatpush1.bf16.msra.mxu0 %v509
    %648 = vmatprep.subr.bf16.mxu0 0
    %649 = vmatpush1.bf16.msra.mxu0 %v510
    %650 = vmatprep.subr.bf16.mxu0 0
    %651 = vmatpush1.bf16.msra.mxu0 %v511
    %652 = vmatprep.subr.bf16.mxu0 0
    %653 = vmatpush1.bf16.msra.mxu0 %v512
    %654 = vmatprep.subr.bf16.mxu0 0
    %655 = vmatpush1.bf16.msra.mxu0 %v513
    %656 = vmatprep.subr.bf16.mxu0 0
    %657 = vmatpush1.bf16.msra.mxu0 %v514
    %658 = vmatprep.subr.bf16.mxu0 0
    %659 = vmatpush1.bf16.msra.mxu0 %v515
    %660 = vmatprep.mubr.bf16.mxu0 %v231
    %661 = vmatmul.mubr.bf16.gmra.mrb[0].mxu0 %v230
    %v662 = vpop.f32.mrb[0].mxu0
    %v663 = vadd.f32 %v242, %v662
    %v664 = vpop.f32.mrb[0].mxu0
    %v665 = vpop.f32.mrb[0].mxu0
    %v666 = vpop.f32.mrb[0].mxu0
    %667 = vdwg.mxu0
    %668 = vmatprep.subr.bf16.mxu0 0
    %669 = vmatpush1.bf16.msra.mxu0 %v516
    %670 = vmatprep.subr.bf16.mxu0 0
    %671 = vmatpush1.bf16.msra.mxu0 %v517
    %672 = vmatprep.subr.bf16.mxu0 0
    %673 = vmatpush1.bf16.msra.mxu0 %v518
    %674 = vmatprep.subr.bf16.mxu0 0
    %675 = vmatpush1.bf16.msra.mxu0 %v519
    %676 = vmatprep.subr.bf16.mxu0 0
    %677 = vmatpush1.bf16.msra.mxu0 %v520
    %678 = vmatprep.subr.bf16.mxu0 0
    %679 = vmatpush1.bf16.msra.mxu0 %v521
    %680 = vmatprep.subr.bf16.mxu0 0
    %681 = vmatpush1.bf16.msra.mxu0 %v522
    %682 = vmatprep.subr.bf16.mxu0 0
    %683 = vmatpush1.bf16.msra.mxu0 %v523
    %684 = vmatprep.subr.bf16.mxu0 0
    %685 = vmatpush1.bf16.msra.mxu0 %v524
    %686 = vmatprep.subr.bf16.mxu0 0
    %687 = vmatpush1.bf16.msra.mxu0 %v525
    %688 = vmatprep.subr.bf16.mxu0 0
    %689 = vmatpush1.bf16.msra.mxu0 %v526
    %690 = vmatprep.subr.bf16.mxu0 0
    %691 = vmatpush1.bf16.msra.mxu0 %v527
    %692 = vmatprep.subr.bf16.mxu0 0
    %693 = vmatpush1.bf16.msra.mxu0 %v528
    %694 = vmatprep.subr.bf16.mxu0 0
    %695 = vmatpush1.bf16.msra.mxu0 %v529
    %696 = vmatprep.subr.bf16.mxu0 0
    %697 = vmatpush1.bf16.msra.mxu0 %v530
    %698 = vmatprep.subr.bf16.mxu0 0
    %699 = vmatpush1.bf16.msra.mxu0 %v531
    %700 = vmatprep.mubr.bf16.mxu0 %v233
    %701 = vmatmul.mubr.bf16.gmra.mrb[0].mxu0 %v232
    %v702 = vpop.f32.mrb[0].mxu0
    %v703 = vadd.f32 %v663, %v702
    %v704 = vpop.f32.mrb[0].mxu0
    %v705 = vpop.f32.mrb[0].mxu0
    %v706 = vpop.f32.mrb[0].mxu0
    %707 = vdwg.mxu0
    %708 = vmatprep.subr.bf16.mxu0 0
    %709 = vmatpush1.bf16.msra.mxu0 %v532
    %710 = vmatprep.subr.bf16.mxu0 0
    %711 = vmatpush1.bf16.msra.mxu0 %v533
    %712 = vmatprep.subr.bf16.mxu0 0
    %713 = vmatpush1.bf16.msra.mxu0 %v534
    %714 = vmatprep.subr.bf16.mxu0 0
    %715 = vmatpush1.bf16.msra.mxu0 %v535
    %716 = vmatprep.subr.bf16.mxu0 0
    %717 = vmatpush1.bf16.msra.mxu0 %v536
    %718 = vmatprep.subr.bf16.mxu0 0
    %719 = vmatpush1.bf16.msra.mxu0 %v537
    %720 = vmatprep.subr.bf16.mxu0 0
    %721 = vmatpush1.bf16.msra.mxu0 %v538
    %722 = vmatprep.subr.bf16.mxu0 0
    %723 = vmatpush1.bf16.msra.mxu0 %v539
    %724 = vmatprep.subr.bf16.mxu0 0
    %725 = vmatpush1.bf16.msra.mxu0 %v540
    %726 = vmatprep.subr.bf16.mxu0 0
    %727 = vmatpush1.bf16.msra.mxu0 %v541
    %728 = vmatprep.subr.bf16.mxu0 0
    %729 = vmatpush1.bf16.msra.mxu0 %v542
    %730 = vmatprep.subr.bf16.mxu0 0
    %731 = vmatpush1.bf16.msra.mxu0 %v543
    %732 = vmatprep.subr.bf16.mxu0 0
    %733 = vmatpush1.bf16.msra.mxu0 %v544
    %734 = vmatprep.subr.bf16.mxu0 0
    %735 = vmatpush1.bf16.msra.mxu0 %v545
    %736 = vmatprep.subr.bf16.mxu0 0
    %737 = vmatpush1.bf16.msra.mxu0 %v546
    %738 = vmatprep.subr.bf16.mxu0 0
    %739 = vmatpush1.bf16.msra.mxu0 %v547
    %740 = vmatprep.mubr.bf16.mxu0 %v235
    %741 = vmatmul.mubr.bf16.gmra.mrb[0].mxu0 %v234
    %v742 = vpop.f32.mrb[0].mxu0
    %v743 = vadd.f32 %v703, %v742
    %v744 = vpop.f32.mrb[0].mxu0
    %v745 = vpop.f32.mrb[0].mxu0
    %v746 = vpop.f32.mrb[0].mxu0
    %747 = vdwg.mxu0
    %748 = vmatprep.subr.bf16.mxu0 0
    %749 = vmatpush1.bf16.msra.mxu0 %v548
    %750 = vmatprep.subr.bf16.mxu0 0
    %751 = vmatpush1.bf16.msra.mxu0 %v549
    %752 = vmatprep.subr.bf16.mxu0 0
    %753 = vmatpush1.bf16.msra.mxu0 %v550
    %754 = vmatprep.subr.bf16.mxu0 0
    %755 = vmatpush1.bf16.msra.mxu0 %v551
    %756 = vmatprep.subr.bf16.mxu0 0
    %757 = vmatpush1.bf16.msra.mxu0 %v552
    %758 = vmatprep.subr.bf16.mxu0 0
    %759 = vmatpush1.bf16.msra.mxu0 %v553
    %760 = vmatprep.subr.bf16.mxu0 0
    %761 = vmatpush1.bf16.msra.mxu0 %v554
    %762 = vmatprep.subr.bf16.mxu0 0
    %763 = vmatpush1.bf16.msra.mxu0 %v555
    %764 = vmatprep.subr.bf16.mxu0 0
    %765 = vmatpush1.bf16.msra.mxu0 %v556
    %766 = vmatprep.subr.bf16.mxu0 0
    %767 = vmatpush1.bf16.msra.mxu0 %v557
    %768 = vmatprep.subr.bf16.mxu0 0
    %769 = vmatpush1.bf16.msra.mxu0 %v558
    %770 = vmatprep.subr.bf16.mxu0 0
    %771 = vmatpush1.bf16.msra.mxu0 %v559
    %772 = vmatprep.subr.bf16.mxu0 0
    %773 = vmatpush1.bf16.msra.mxu0 %v560
    %774 = vmatprep.subr.bf16.mxu0 0
    %775 = vmatpush1.bf16.msra.mxu0 %v561
    %776 = vmatprep.subr.bf16.mxu0 0
    %777 = vmatpush1.bf16.msra.mxu0 %v562
    %778 = vmatprep.subr.bf16.mxu0 0
    %779 = vmatpush1.bf16.msra.mxu0 %v563
    %780 = vmatprep.mubr.bf16.mxu0 %v237
    %781 = vmatmul.mubr.bf16.gmra.mrb[0].mxu0 %v236
    %v782 = vpop.f32.mrb[0].mxu0
    %v783 = vadd.f32 %v743, %v782
    %v784 = vpop.f32.mrb[0].mxu0
    %v785 = vpop.f32.mrb[0].mxu0
    %v786 = vpop.f32.mrb[0].mxu0
    %787 = vdwg.mxu0
    %v788 = vmul.f32 %v783, 0.5
    %v789 = vmul.f32 %v783, 0.70710677
    %v790 = vand.u32 2147483647, %v789
    %v791 = vmul.f32 %v790, 0.3275911
    %v792 = vadd.f32 %v791, 1.0
    %v793 = vrcp.pop %v792
    %v794 = vmul.f32 1.0, %v793
    %v795 = vmul.f32 %v794, 1.0614054
    %v796 = vadd.f32 %v795, -1.4531521
    %v797 = vmul.f32 %v796, %v794
    %v798 = vadd.f32 %v797, 1.4214138
    %v799 = vmul.f32 %v798, %v794
    %v800 = vadd.f32 %v799, -0.28449672
    %v801 = vmul.f32 %v800, %v794
    %v802 = vadd.f32 %v801, 0.2548296
    %v803 = vmul.f32 %v802, %v794
    %v804 = vsub.f32 0.0, %v790
    %v805 = vmul.f32 %v804, %v790
    %v806 = vmul.f32 %v805, 1.442695
    %v807 = vpow.pop %v806
    %v808 = vmul.f32 %v803, %v807
    %v809 = vsub.f32 1.0, %v808
    %vm810 = vcmp.lt.f32.partialorder %v789, 0.0
    %v811 = vsub.f32 0.0, %v809
    %v812 = vsel %vm810, %v811, %v809
    %v813 = vadd.f32 %v812, 1.0
    %v814 = vmul.f32 %v788, %v813
    %v815 = vpack.c.bf16 %v814, %v814
    %v817 = vlaneseq
    %v818 = vshrl.u32 %v817, 7
    %v819 = vsub.s32 0, %v818
    %v820 = vrot.slane %v183, %v819
    %v838 = vunpack.c.l.b16 %v167
    %v839 = vunpack.c.l.b16 %v168
    %v840 = vunpack.c.l.b16 %v169
    %v841 = vunpack.c.l.b16 %v170
    %v842 = vunpack.c.l.b16 %v171
    %v843 = vunpack.c.l.b16 %v172
    %v844 = vunpack.c.l.b16 %v173
    %v845 = vunpack.c.l.b16 %v174
    %v846 = vunpack.c.l.b16 %v175
    %v847 = vunpack.c.l.b16 %v176
    %v848 = vunpack.c.l.b16 %v177
    %v849 = vunpack.c.l.b16 %v178
    %v850 = vunpack.c.l.b16 %v179
    %v851 = vunpack.c.l.b16 %v180
    %v852 = vunpack.c.l.b16 %v181
    %v853 = vunpack.c.l.b16 %v182
    %v854 = vpack.c.b16 %v839, %v838
    %v855 = vpack.c.b16 %v841, %v840
    %v856 = vpack.c.b16 %v843, %v842
    %v857 = vpack.c.b16 %v845, %v844
    %v858 = vpack.c.b16 %v847, %v846
    %v859 = vpack.c.b16 %v849, %v848
    %v860 = vpack.c.b16 %v851, %v850
    %v861 = vpack.c.b16 %v853, %v852
    %870 = vmatprep.subr.bf16.mxu0 0
    %871 = vmatpush1.bf16.msra.mxu0 %v854
    %872 = vmatprep.subr.bf16.mxu0 0
    %873 = vmatpush1.bf16.msra.mxu0 %v855
    %874 = vmatprep.subr.bf16.mxu0 0
    %875 = vmatpush1.bf16.msra.mxu0 %v856
    %876 = vmatprep.subr.bf16.mxu0 0
    %877 = vmatpush1.bf16.msra.mxu0 %v857
    %878 = vmatprep.subr.bf16.mxu0 0
    %879 = vmatpush1.bf16.msra.mxu0 %v858
    %880 = vmatprep.subr.bf16.mxu0 0
    %881 = vmatpush1.bf16.msra.mxu0 %v859
    %882 = vmatprep.subr.bf16.mxu0 0
    %883 = vmatpush1.bf16.msra.mxu0 %v860
    %884 = vmatprep.subr.bf16.mxu0 0
    %885 = vmatpush1.bf16.msra.mxu0 %v861
    %886 = vmatprep.subr.bf16.mxu0 0
    %887 = vmatpush1.bf16.msra.mxu0 0
    %888 = vmatprep.subr.bf16.mxu0 0
    %889 = vmatpush1.bf16.msra.mxu0 0
    %890 = vmatprep.subr.bf16.mxu0 0
    %891 = vmatpush1.bf16.msra.mxu0 0
    %892 = vmatprep.subr.bf16.mxu0 0
    %893 = vmatpush1.bf16.msra.mxu0 0
    %894 = vmatprep.subr.bf16.mxu0 0
    %895 = vmatpush1.bf16.msra.mxu0 0
    %896 = vmatprep.subr.bf16.mxu0 0
    %897 = vmatpush1.bf16.msra.mxu0 0
    %898 = vmatprep.subr.bf16.mxu0 0
    %899 = vmatpush1.bf16.msra.mxu0 0
    %900 = vmatprep.subr.bf16.mxu0 0
    %901 = vmatpush1.bf16.msra.mxu0 0
    %902 = vmatprep.mubr.bf16.mxu0 0
    %903 = vmatmul.mubr.bf16.gmra.mrb[0].mxu0 %v815
    %v904 = vpop.f32.mrb[0].mxu0
    %v905 = vadd.f32 %v820, %v904
    %v906 = vpop.f32.mrb[0].mxu0
    %v907 = vpop.f32.mrb[0].mxu0
    %v908 = vpop.f32.mrb[0].mxu0
    %909 = vdwg.mxu0
    %910 = vst [vmem:[%s6] sm:$0x3] %v905
    %v911 = vld [vmem:[%s1] sm:$0xff]
    %v912 = vld [vmem:[%s1 + $0x8] sm:$0xff]
    %v915 = vcombine.high %v911, %v911
    %v917 = vunpack.c.l.s4 1983009808
    %v918 = vunpack.c.0.s8 %v917
    %v919 = vlaneseq
    %v920 = vshrl.u32 %v919, 7
    %v921 = vsub.s32 %v918, %v920
    %v922 = vrot.slane %v911, %v921
    %v924 = vunpack.c.l.s4 1983009808
    %v925 = vunpack.c.0.s8 %v924
    %v926 = vlaneseq
    %v927 = vshrl.u32 %v926, 7
    %v928 = vsub.s32 %v925, %v927
    %v929 = vrot.slane %v915, %v928
    %v930 = vcombine.high %v922, %v922
    %v931 = vcombine.high %v929, %v929
    %v932 = vcombine.high %v912, %v912
    %v934 = vunpack.c.l.s4 1983009808
    %v935 = vunpack.c.0.s8 %v934
    %v936 = vlaneseq
    %v937 = vshrl.u32 %v936, 7
    %v938 = vsub.s32 %v935, %v937
    %v939 = vrot.slane %v912, %v938
    %v941 = vunpack.c.l.s4 1983009808
    %v942 = vunpack.c.0.s8 %v941
    %v943 = vlaneseq
    %v944 = vshrl.u32 %v943, 7
    %v945 = vsub.s32 %v942, %v944
    %v946 = vrot.slane %v932, %v945
    %v947 = vcombine.high %v939, %v939
    %v948 = vcombine.high %v946, %v946
    %v957 = vpack.c.bf16 %v922, %v922
    %v958 = vpack.c.bf16 %v930, %v930
    %v959 = vpack.c.bf16 %v929, %v929
    %v960 = vpack.c.bf16 %v931, %v931
    %v961 = vpack.c.bf16 %v939, %v939
    %v962 = vpack.c.bf16 %v947, %v947
    %v963 = vpack.c.bf16 %v946, %v946
    %v964 = vpack.c.bf16 %v948, %v948
    %965 = vmatprep.subr.bf16.mxu0 0
    %966 = vmatpush1.bf16.msra.mxu0 %v500
    %967 = vmatprep.subr.bf16.mxu0 0
    %968 = vmatpush1.bf16.msra.mxu0 %v501
    %969 = vmatprep.subr.bf16.mxu0 0
    %970 = vmatpush1.bf16.msra.mxu0 %v502
    %971 = vmatprep.subr.bf16.mxu0 0
    %972 = vmatpush1.bf16.msra.mxu0 %v503
    %973 = vmatprep.subr.bf16.mxu0 0
    %974 = vmatpush1.bf16.msra.mxu0 %v504
    %975 = vmatprep.subr.bf16.mxu0 0
    %976 = vmatpush1.bf16.msra.mxu0 %v505
    %977 = vmatprep.subr.bf16.mxu0 0
    %978 = vmatpush1.bf16.msra.mxu0 %v506
    %979 = vmatprep.subr.bf16.mxu0 0
    %980 = vmatpush1.bf16.msra.mxu0 %v507
    %981 = vmatprep.subr.bf16.mxu0 0
    %982 = vmatpush1.bf16.msra.mxu0 %v508
    %983 = vmatprep.subr.bf16.mxu0 0
    %984 = vmatpush1.bf16.msra.mxu0 %v509
    %985 = vmatprep.subr.bf16.mxu0 0
    %986 = vmatpush1.bf16.msra.mxu0 %v510
    %987 = vmatprep.subr.bf16.mxu0 0
    %988 = vmatpush1.bf16.msra.mxu0 %v511
    %989 = vmatprep.subr.bf16.mxu0 0
    %990 = vmatpush1.bf16.msra.mxu0 %v512
    %991 = vmatprep.subr.bf16.mxu0 0
    %992 = vmatpush1.bf16.msra.mxu0 %v513
    %993 = vmatprep.subr.bf16.mxu0 0
    %994 = vmatpush1.bf16.msra.mxu0 %v514
    %995 = vmatprep.subr.bf16.mxu0 0
    %996 = vmatpush1.bf16.msra.mxu0 %v515
    %997 = vmatprep.mubr.bf16.mxu0 %v958
    %998 = vmatmul.mubr.bf16.gmra.mrb[0].mxu0 %v957
    %v999 = vpop.f32.mrb[0].mxu0
    %v1000 = vadd.f32 %v242, %v999
    %v1001 = vpop.f32.mrb[0].mxu0
    %v1002 = vpop.f32.mrb[0].mxu0
    %v1003 = vpop.f32.mrb[0].mxu0
    %1004 = vdwg.mxu0
    %1005 = vmatprep.subr.bf16.mxu0 0
    %1006 = vmatpush1.bf16.msra.mxu0 %v516
    %1007 = vmatprep.subr.bf16.mxu0 0
    %1008 = vmatpush1.bf16.msra.mxu0 %v517
    %1009 = vmatprep.subr.bf16.mxu0 0
    %1010 = vmatpush1.bf16.msra.mxu0 %v518
    %1011 = vmatprep.subr.bf16.mxu0 0
    %1012 = vmatpush1.bf16.msra.mxu0 %v519
    %1013 = vmatprep.subr.bf16.mxu0 0
    %1014 = vmatpush1.bf16.msra.mxu0 %v520
    %1015 = vmatprep.subr.bf16.mxu0 0
    %1016 = vmatpush1.bf16.msra.mxu0 %v521
    %1017 = vmatprep.subr.bf16.mxu0 0
    %1018 = vmatpush1.bf16.msra.mxu0 %v522
    %1019 = vmatprep.subr.bf16.mxu0 0
    %1020 = vmatpush1.bf16.msra.mxu0 %v523
    %1021 = vmatprep.subr.bf16.mxu0 0
    %1022 = vmatpush1.bf16.msra.mxu0 %v524
    %1023 = vmatprep.subr.bf16.mxu0 0
    %1024 = vmatpush1.bf16.msra.mxu0 %v525
    %1025 = vmatprep.subr.bf16.mxu0 0
    %1026 = vmatpush1.bf16.msra.mxu0 %v526
    %1027 = vmatprep.subr.bf16.mxu0 0
    %1028 = vmatpush1.bf16.msra.mxu0 %v527
    %1029 = vmatprep.subr.bf16.mxu0 0
    %1030 = vmatpush1.bf16.msra.mxu0 %v528
    %1031 = vmatprep.subr.bf16.mxu0 0
    %1032 = vmatpush1.bf16.msra.mxu0 %v529
    %1033 = vmatprep.subr.bf16.mxu0 0
    %1034 = vmatpush1.bf16.msra.mxu0 %v530
    %1035 = vmatprep.subr.bf16.mxu0 0
    %1036 = vmatpush1.bf16.msra.mxu0 %v531
    %1037 = vmatprep.mubr.bf16.mxu0 %v960
    %1038 = vmatmul.mubr.bf16.gmra.mrb[0].mxu0 %v959
    %v1039 = vpop.f32.mrb[0].mxu0
    %v1040 = vadd.f32 %v1000, %v1039
    %v1041 = vpop.f32.mrb[0].mxu0
    %v1042 = vpop.f32.mrb[0].mxu0
    %v1043 = vpop.f32.mrb[0].mxu0
    %1044 = vdwg.mxu0
    %1045 = vmatprep.subr.bf16.mxu0 0
    %1046 = vmatpush1.bf16.msra.mxu0 %v532
    %1047 = vmatprep.subr.bf16.mxu0 0
    %1048 = vmatpush1.bf16.msra.mxu0 %v533
    %1049 = vmatprep.subr.bf16.mxu0 0
    %1050 = vmatpush1.bf16.msra.mxu0 %v534
    %1051 = vmatprep.subr.bf16.mxu0 0
    %1052 = vmatpush1.bf16.msra.mxu0 %v535
    %1053 = vmatprep.subr.bf16.mxu0 0
    %1054 = vmatpush1.bf16.msra.mxu0 %v536
    %1055 = vmatprep.subr.bf16.mxu0 0
    %1056 = vmatpush1.bf16.msra.mxu0 %v537
    %1057 = vmatprep.subr.bf16.mxu0 0
    %1058 = vmatpush1.bf16.msra.mxu0 %v538
    %1059 = vmatprep.subr.bf16.mxu0 0
    %1060 = vmatpush1.bf16.msra.mxu0 %v539
    %1061 = vmatprep.subr.bf16.mxu0 0
    %1062 = vmatpush1.bf16.msra.mxu0 %v540
    %1063 = vmatprep.subr.bf16.mxu0 0
    %1064 = vmatpush1.bf16.msra.mxu0 %v541
    %1065 = vmatprep.subr.bf16.mxu0 0
    %1066 = vmatpush1.bf16.msra.mxu0 %v542
    %1067 = vmatprep.subr.bf16.mxu0 0
    %1068 = vmatpush1.bf16.msra.mxu0 %v543
    %1069 = vmatprep.subr.bf16.mxu0 0
    %1070 = vmatpush1.bf16.msra.mxu0 %v544
    %1071 = vmatprep.subr.bf16.mxu0 0
    %1072 = vmatpush1.bf16.msra.mxu0 %v545
    %1073 = vmatprep.subr.bf16.mxu0 0
    %1074 = vmatpush1.bf16.msra.mxu0 %v546
    %1075 = vmatprep.subr.bf16.mxu0 0
    %1076 = vmatpush1.bf16.msra.mxu0 %v547
    %1077 = vmatprep.mubr.bf16.mxu0 %v962
    %1078 = vmatmul.mubr.bf16.gmra.mrb[0].mxu0 %v961
    %v1079 = vpop.f32.mrb[0].mxu0
    %v1080 = vadd.f32 %v1040, %v1079
    %v1081 = vpop.f32.mrb[0].mxu0
    %v1082 = vpop.f32.mrb[0].mxu0
    %v1083 = vpop.f32.mrb[0].mxu0
    %1084 = vdwg.mxu0
    %1085 = vmatprep.subr.bf16.mxu0 0
    %1086 = vmatpush1.bf16.msra.mxu0 %v548
    %1087 = vmatprep.subr.bf16.mxu0 0
    %1088 = vmatpush1.bf16.msra.mxu0 %v549
    %1089 = vmatprep.subr.bf16.mxu0 0
    %1090 = vmatpush1.bf16.msra.mxu0 %v550
    %1091 = vmatprep.subr.bf16.mxu0 0
    %1092 = vmatpush1.bf16.msra.mxu0 %v551
    %1093 = vmatprep.subr.bf16.mxu0 0
    %1094 = vmatpush1.bf16.msra.mxu0 %v552
    %1095 = vmatprep.subr.bf16.mxu0 0
    %1096 = vmatpush1.bf16.msra.mxu0 %v553
    %1097 = vmatprep.subr.bf16.mxu0 0
    %1098 = vmatpush1.bf16.msra.mxu0 %v554
    %1099 = vmatprep.subr.bf16.mxu0 0
    %1100 = vmatpush1.bf16.msra.mxu0 %v555
    %1101 = vmatprep.subr.bf16.mxu0 0
    %1102 = vmatpush1.bf16.msra.mxu0 %v556
    %1103 = vmatprep.subr.bf16.mxu0 0
    %1104 = vmatpush1.bf16.msra.mxu0 %v557
    %1105 = vmatprep.subr.bf16.mxu0 0
    %1106 = vmatpush1.bf16.msra.mxu0 %v558
    %1107 = vmatprep.subr.bf16.mxu0 0
    %1108 = vmatpush1.bf16.msra.mxu0 %v559
    %1109 = vmatprep.subr.bf16.mxu0 0
    %1110 = vmatpush1.bf16.msra.mxu0 %v560
    %1111 = vmatprep.subr.bf16.mxu0 0
    %1112 = vmatpush1.bf16.msra.mxu0 %v561
    %1113 = vmatprep.subr.bf16.mxu0 0
    %1114 = vmatpush1.bf16.msra.mxu0 %v562
    %1115 = vmatprep.subr.bf16.mxu0 0
    %1116 = vmatpush1.bf16.msra.mxu0 %v563
    %1117 = vmatprep.mubr.bf16.mxu0 %v964
    %1118 = vmatmul.mubr.bf16.gmra.mrb[0].mxu0 %v963
    %v1119 = vpop.f32.mrb[0].mxu0
    %v1120 = vadd.f32 %v1080, %v1119
    %v1121 = vpop.f32.mrb[0].mxu0
    %v1122 = vpop.f32.mrb[0].mxu0
    %v1123 = vpop.f32.mrb[0].mxu0
    %1124 = vdwg.mxu0
    %v1125 = vmul.f32 %v1120, 0.5
    %v1126 = vmul.f32 %v1120, 0.70710677
    %v1127 = vand.u32 2147483647, %v1126
    %v1128 = vmul.f32 %v1127, 0.3275911
    %v1129 = vadd.f32 %v1128, 1.0
    %v1130 = vrcp.pop %v1129
    %v1131 = vmul.f32 1.0, %v1130
    %v1132 = vmul.f32 %v1131, 1.0614054
    %v1133 = vadd.f32 %v1132, -1.4531521
    %v1134 = vmul.f32 %v1133, %v1131
    %v1135 = vadd.f32 %v1134, 1.4214138
    %v1136 = vmul.f32 %v1135, %v1131
    %v1137 = vadd.f32 %v1136, -0.28449672
    %v1138 = vmul.f32 %v1137, %v1131
    %v1139 = vadd.f32 %v1138, 0.2548296
    %v1140 = vmul.f32 %v1139, %v1131
    %v1141 = vsub.f32 0.0, %v1127
    %v1142 = vmul.f32 %v1141, %v1127
    %v1143 = vmul.f32 %v1142, 1.442695
    %v1144 = vpow.pop %v1143
    %v1145 = vmul.f32 %v1140, %v1144
    %v1146 = vsub.f32 1.0, %v1145
    %vm1147 = vcmp.lt.f32.partialorder %v1126, 0.0
    %v1148 = vsub.f32 0.0, %v1146
    %v1149 = vsel %vm1147, %v1148, %v1146
    %v1150 = vadd.f32 %v1149, 1.0
    %v1151 = vmul.f32 %v1125, %v1150
    %v1152 = vpack.c.bf16 %v1151, %v1151
    %1153 = vmatprep.subr.bf16.mxu0 0
    %1154 = vmatpush1.bf16.msra.mxu0 %v854
    %1155 = vmatprep.subr.bf16.mxu0 0
    %1156 = vmatpush1.bf16.msra.mxu0 %v855
    %1157 = vmatprep.subr.bf16.mxu0 0
    %1158 = vmatpush1.bf16.msra.mxu0 %v856
    %1159 = vmatprep.subr.bf16.mxu0 0
    %1160 = vmatpush1.bf16.msra.mxu0 %v857
    %1161 = vmatprep.subr.bf16.mxu0 0
    %1162 = vmatpush1.bf16.msra.mxu0 %v858
    %1163 = vmatprep.subr.bf16.mxu0 0
    %1164 = vmatpush1.bf16.msra.mxu0 %v859
    %1165 = vmatprep.subr.bf16.mxu0 0
    %1166 = vmatpush1.bf16.msra.mxu0 %v860
    %1167 = vmatprep.subr.bf16.mxu0 0
    %1168 = vmatpush1.bf16.msra.mxu0 %v861
    %1169 = vmatprep.subr.bf16.mxu0 0
    %1170 = vmatpush1.bf16.msra.mxu0 0
    %1171 = vmatprep.subr.bf16.mxu0 0
    %1172 = vmatpush1.bf16.msra.mxu0 0
    %1173 = vmatprep.subr.bf16.mxu0 0
    %1174 = vmatpush1.bf16.msra.mxu0 0
    %1175 = vmatprep.subr.bf16.mxu0 0
    %1176 = vmatpush1.bf16.msra.mxu0 0
    %1177 = vmatprep.subr.bf16.mxu0 0
    %1178 = vmatpush1.bf16.msra.mxu0 0
    %1179 = vmatprep.subr.bf16.mxu0 0
    %1180 = vmatpush1.bf16.msra.mxu0 0
    %1181 = vmatprep.subr.bf16.mxu0 0
    %1182 = vmatpush1.bf16.msra.mxu0 0
    %1183 = vmatprep.subr.bf16.mxu0 0
    %1184 = vmatpush1.bf16.msra.mxu0 0
    %1185 = vmatprep.mubr.bf16.mxu0 0
    %1186 = vmatmul.mubr.bf16.gmra.mrb[0].mxu0 %v1152
    %v1187 = vpop.f32.mrb[0].mxu0
    %v1188 = vadd.f32 %v820, %v1187
    %v1189 = vpop.f32.mrb[0].mxu0
    %v1190 = vpop.f32.mrb[0].mxu0
    %v1191 = vpop.f32.mrb[0].mxu0
    %1192 = vdwg.mxu0
    %s1193 = scalar_lea.vmem %s6, 2
    %1194 = vst [vmem:[%s1193] sm:$0x3] %v1188
    // Predicated region
    $region30: #{siamese_forward.1} parent=1 // pred_check
      _
    $region31: #{siamese_forward.1} parent=1 // pred_check_branch
      %1196 = sbr.rel (0) target = $region33
    $region32: #{siamese_forward.1} parent=1 // pred_region
      _
    $region33: #{siamese_forward.1} parent=1 // pred_fallthru
      _
    // Predicated region
    $region34: #{siamese_forward.1} parent=1 // pred_check
      _
    $region35: #{siamese_forward.1} parent=1 // pred_check_branch
      %1198 = sbr.rel (0) target = $region37
    $region36: #{siamese_forward.1} parent=1 // pred_region
      _
    $region37: #{siamese_forward.1} parent=1 // pred_fallthru
      _
    %1199 = vsyncpa [#allocation3], 1

</llo_original>
